<compile_context>
chip_gen: v7x
topology: tpu7x:2x2x1
jax: 0.10.0
libtpu: 0.0.40
codegen_flags: <defaults>
</compile_context>

<pallas_src>
import jax
import jax.numpy as jnp
from jax.experimental import pallas as pl
from jax.experimental.pallas import tpu as pltpu

N_INPUT = 4
N_HIDDEN = 64
N_CONTROL = 2           # unused by forward(), kept for documentation
OUT_WIDTH = 8           # lane-major packed output: [h, dh0..dh3, 0, 0, 0]


def cbfnet_kernel(s_ref, w1_ref, b1_ref, w2t_ref, b2_ref, out_ref):
    s = s_ref[...]        # (1, N_INPUT)           state as a lane row
    w1 = w1_ref[...]      # (N_HIDDEN, N_INPUT)    original W1 (hidden on sublanes)
    b1 = b1_ref[...]      # (N_HIDDEN, 1)
    w2t = w2t_ref[...]    # (N_HIDDEN, N_HIDDEN)   W2.T (m on sublanes, k on lanes)
    b2 = b2_ref[...]      # (1, N_HIDDEN)

    inv_h = jnp.float32(1.0 / N_HIDDEN)

    # Layer 1 (VPU + lane reduce): fc1[m] = tanh(sum_j W1[m,j]*s[j] + b1[m])
    fc1 = jnp.tanh(jnp.sum(w1 * s, axis=1, keepdims=True) + b1)            # (H, 1)

    # Layer 2 (VPU + sublane reduce): fc2[k] = tanh(sum_m W2t[m,k]*fc1[m] + b2[k])
    fc2 = jnp.tanh(jnp.sum(w2t * fc1, axis=0, keepdims=True) + b2)         # (1, H)

    # h = mean_k fc2[k]
    h = jnp.sum(fc2, axis=1, keepdims=True) * inv_h                        # (1, 1)

    # tanh' terms
    d1 = 1.0 - fc1 * fc1                                                   # (H, 1)
    d2 = 1.0 - fc2 * fc2                                                   # (1, H)

    # Fused Jacobian-mean:
    #   v[m]  = sum_k W2t[m,k] * d2[k]   (= sum_k W2[k,m] * d2[k])
    #   dh[j] = (1/H) * sum_m W1[m,j] * d1[m] * v[m]
    v = jnp.sum(w2t * d2, axis=1, keepdims=True)                           # (H, 1)
    u = d1 * v                                                             # (H, 1)
    dh = jnp.sum(w1 * u, axis=0, keepdims=True) * inv_h                    # (1, N_INPUT)

    # Single lane-major output tile: [h, dh, zero pad]
    out_ref[:, 0:1] = h
    out_ref[:, 1:1 + N_INPUT] = dh
    out_ref[:, 1 + N_INPUT:] = jnp.zeros((1, OUT_WIDTH - 1 - N_INPUT), jnp.float32)


def prepare_cbfnet_params(w1, b1, w2, b2):
    """One-time parameter layout prep (hoisted out of the per-call path)."""
    return (
        w1.astype(jnp.float32),                             # (H, I)  original W1
        b1.reshape(N_HIDDEN, 1).astype(jnp.float32),        # (H, 1)
        w2.T.astype(jnp.float32),                           # (H, H)  W2.T
        b2.reshape(1, N_HIDDEN).astype(jnp.float32),        # (1, H)
    )


@jax.jit
def cbfnet_forward(s, params):
    """s: (4,) state, params: output of prepare_cbfnet_params -> (h scalar, dh (4,))."""
    w1, b1c, w2t, b2r = params
    s_row = s.reshape(1, N_INPUT).astype(jnp.float32)

    out = pl.pallas_call(
        cbfnet_kernel,
        out_shape=jax.ShapeDtypeStruct((1, OUT_WIDTH), jnp.float32),
        in_specs=[
            pl.BlockSpec(memory_space=pltpu.MemorySpace.VMEM),   # s      (1, 4)
            pl.BlockSpec(memory_space=pltpu.MemorySpace.VMEM),   # W1     (64, 4)
            pl.BlockSpec(memory_space=pltpu.MemorySpace.VMEM),   # b1     (64, 1)
            pl.BlockSpec(memory_space=pltpu.MemorySpace.VMEM),   # W2.T   (64, 64)
            pl.BlockSpec(memory_space=pltpu.MemorySpace.VMEM),   # b2     (1, 64)
        ],
        out_specs=pl.BlockSpec(memory_space=pltpu.MemorySpace.VMEM),
    )(s_row, w1, b1c, w2t, b2r)

    return out[0, 0], out[0, 1:1 + N_INPUT]


def ref_forward(s, w1, b1, w2, b2):
    """Pure-JAX reference mirroring the PyTorch forward."""
    fc1 = jnp.tanh(w1 @ s + b1)
    fc2 = jnp.tanh(w2 @ fc1 + b2)
    h = fc2.mean()
    dfc1 = (1.0 - fc1 ** 2)[:, None] * w1
    dfc2 = ((1.0 - fc2 ** 2)[:, None] * w2) @ dfc1
    return h, dfc2.mean(0)


if __name__ == "__main__":
    key = jax.random.PRNGKey(0)
    k_s, k_w1, k_b1, k_w2, k_b2 = jax.random.split(key, 5)

    # Deterministic parameter init (same scheme as torch.nn.Linear default:
    # U(-1/sqrt(fan_in), 1/sqrt(fan_in))).
    bound1 = 1.0 / jnp.sqrt(jnp.float32(N_INPUT))
    bound2 = 1.0 / jnp.sqrt(jnp.float32(N_HIDDEN))
    w1 = jax.random.uniform(k_w1, (N_HIDDEN, N_INPUT), jnp.float32, -bound1, bound1)
    b1 = jax.random.uniform(k_b1, (N_HIDDEN,), jnp.float32, -bound1, bound1)
    w2 = jax.random.uniform(k_w2, (N_HIDDEN, N_HIDDEN), jnp.float32, -bound2, bound2)
    b2 = jax.random.uniform(k_b2, (N_HIDDEN,), jnp.float32, -bound2, bound2)

    # Example state vector s (n_input = 4); the PyTorch forward expects a 1-D state.
    s = jax.random.normal(k_s, (N_INPUT,), jnp.float32)

    params = prepare_cbfnet_params(w1, b1, w2, b2)
    h, dh = cbfnet_forward(s, params)
    h = jax.block_until_ready(h)
    dh = jax.block_until_ready(dh)

    h_ref, dh_ref = ref_forward(s, w1, b1, w2, b2)
    assert jnp.allclose(h, h_ref, atol=1e-5, rtol=1e-5), (h, h_ref)
    assert jnp.allclose(dh, dh_ref, atol=1e-5, rtol=1e-5), (dh, dh_ref)

    print("KERNEL_OK")
</pallas_src>

<mosaic_0001>
module attributes {stable_mosaic.version = 11 : i64} {
  func.func @cbfnet_kernel(%arg0: memref<1x4xf32, #tpu.memory_space<vmem>>, %arg1: memref<64x4xf32, #tpu.memory_space<vmem>>, %arg2: memref<64x1xf32, #tpu.memory_space<vmem>>, %arg3: memref<64x64xf32, #tpu.memory_space<vmem>>, %arg4: memref<1x64xf32, #tpu.memory_space<vmem>>, %arg5: memref<1x8xf32, #tpu.memory_space<vmem>>) attributes {dimension_semantics = [], scalar_prefetch = 0 : i64, scratch_operands = 0 : i64, tpu.core_type = #tpu.core_type<tc>} {
    %c0 = arith.constant 0 : index
    %c0_0 = arith.constant 0 : index
    %0 = vector.load %arg0[%c0, %c0_0] : memref<1x4xf32, #tpu.memory_space<vmem>>, vector<1x4xf32>
    %c0_1 = arith.constant 0 : index
    %c0_2 = arith.constant 0 : index
    %1 = vector.load %arg1[%c0_1, %c0_2] : memref<64x4xf32, #tpu.memory_space<vmem>>, vector<64x4xf32>
    %c0_3 = arith.constant 0 : index
    %c0_4 = arith.constant 0 : index
    %2 = vector.load %arg2[%c0_3, %c0_4] : memref<64x1xf32, #tpu.memory_space<vmem>>, vector<64x1xf32>
    %c0_5 = arith.constant 0 : index
    %c0_6 = arith.constant 0 : index
    %3 = vector.load %arg3[%c0_5, %c0_6] : memref<64x64xf32, #tpu.memory_space<vmem>>, vector<64x64xf32>
    %c0_7 = arith.constant 0 : index
    %c0_8 = arith.constant 0 : index
    %4 = vector.load %arg4[%c0_7, %c0_8] : memref<1x64xf32, #tpu.memory_space<vmem>>, vector<1x64xf32>
    %5 = vector.broadcast %0 : vector<1x4xf32> to vector<64x4xf32>
    %6 = arith.mulf %1, %5 : vector<64x4xf32>
    %cst = arith.constant dense<0.000000e+00> : vector<64xf32>
    %7 = vector.multi_reduction <add>, %6, %cst [1] : vector<64x4xf32> to vector<64xf32>
    %8 = vector.shape_cast %7 : vector<64xf32> to vector<64x1xf32>
    %9 = arith.addf %8, %2 : vector<64x1xf32>
    %10 = math.tanh %9 : vector<64x1xf32>
    %11 = vector.broadcast %10 : vector<64x1xf32> to vector<64x64xf32>
    %12 = arith.mulf %3, %11 : vector<64x64xf32>
    %cst_9 = arith.constant dense<0.000000e+00> : vector<64xf32>
    %13 = vector.multi_reduction <add>, %12, %cst_9 [0] : vector<64x64xf32> to vector<64xf32>
    %14 = vector.shape_cast %13 : vector<64xf32> to vector<1x64xf32>
    %15 = arith.addf %14, %4 : vector<1x64xf32>
    %16 = math.tanh %15 : vector<1x64xf32>
    %cst_10 = arith.constant dense<0.000000e+00> : vector<1xf32>
    %17 = vector.multi_reduction <add>, %16, %cst_10 [1] : vector<1x64xf32> to vector<1xf32>
    %18 = vector.shape_cast %17 : vector<1xf32> to vector<1x1xf32>
    %cst_11 = arith.constant 1.562500e-02 : f32
    %19 = vector.broadcast %cst_11 : f32 to vector<1x1xf32>
    %20 = arith.mulf %18, %19 : vector<1x1xf32>
    %21 = arith.mulf %10, %10 : vector<64x1xf32>
    %cst_12 = arith.constant 1.000000e+00 : f32
    %22 = vector.broadcast %cst_12 : f32 to vector<64x1xf32>
    %23 = arith.subf %22, %21 : vector<64x1xf32>
    %24 = arith.mulf %16, %16 : vector<1x64xf32>
    %cst_13 = arith.constant 1.000000e+00 : f32
    %25 = vector.broadcast %cst_13 : f32 to vector<1x64xf32>
    %26 = arith.subf %25, %24 : vector<1x64xf32>
    %27 = vector.broadcast %26 : vector<1x64xf32> to vector<64x64xf32>
    %28 = arith.mulf %3, %27 : vector<64x64xf32>
    %cst_14 = arith.constant dense<0.000000e+00> : vector<64xf32>
    %29 = vector.multi_reduction <add>, %28, %cst_14 [1] : vector<64x64xf32> to vector<64xf32>
    %30 = vector.shape_cast %29 : vector<64xf32> to vector<64x1xf32>
    %31 = arith.mulf %23, %30 : vector<64x1xf32>
    %32 = vector.broadcast %31 : vector<64x1xf32> to vector<64x4xf32>
    %33 = arith.mulf %1, %32 : vector<64x4xf32>
    %cst_15 = arith.constant dense<0.000000e+00> : vector<4xf32>
    %34 = vector.multi_reduction <add>, %33, %cst_15 [0] : vector<64x4xf32> to vector<4xf32>
    %35 = vector.shape_cast %34 : vector<4xf32> to vector<1x4xf32>
    %cst_16 = arith.constant 1.562500e-02 : f32
    %36 = vector.broadcast %cst_16 : f32 to vector<1x4xf32>
    %37 = arith.mulf %35, %36 : vector<1x4xf32>
    %c0_17 = arith.constant 0 : index
    %c0_18 = arith.constant 0 : index
    %38 = vector.load %arg5[%c0_17, %c0_18] : memref<1x8xf32, #tpu.memory_space<vmem>>, vector<1x1xf32>
    tpu.vector_store %arg5[%c0_17, %c0_18], %20 {strides = array<i32>} : memref<1x8xf32, #tpu.memory_space<vmem>>, vector<1x1xf32>,
    %c0_19 = arith.constant 0 : index
    %c1 = arith.constant 1 : index
    %39 = vector.load %arg5[%c0_19, %c1] : memref<1x8xf32, #tpu.memory_space<vmem>>, vector<1x4xf32>
    tpu.vector_store %arg5[%c0_19, %c1], %37 {strides = array<i32>} : memref<1x8xf32, #tpu.memory_space<vmem>>, vector<1x4xf32>,
    %cst_20 = arith.constant 0.000000e+00 : f32
    %40 = vector.broadcast %cst_20 : f32 to vector<1x3xf32>
    %c0_21 = arith.constant 0 : index
    %c5 = arith.constant 5 : index
    %41 = vector.load %arg5[%c0_21, %c5] : memref<1x8xf32, #tpu.memory_space<vmem>>, vector<1x3xf32>
    tpu.vector_store %arg5[%c0_21, %c5], %40 {strides = array<i32>} : memref<1x8xf32, #tpu.memory_space<vmem>>, vector<1x3xf32>,
    return
  }
}

</mosaic_0001>

<llo_original>
// kernel: cbfnet_forward.1
$region0: #{cbfnet_forward.1}
  #allocation0 [shape = 'u32[]', space=smem, size = 0x4, offset = 0x4, fixed_abs, tag = 'smem constant byte address 0x4 - core index']
  #allocation1 [shape = 'u32[144,128]{1,0:T(1,128)}', space=vmem, size = 0x12000, scoped, tag = 'internal scratch']
  %s0 = inlined_call_operand.vmem [shape: f32[1,4], index: 0, kind: input, shape index: {}]
  %s1 = inlined_call_operand.vmem [shape: f32[64,4], index: 1, kind: input, shape index: {}]
  %s2 = inlined_call_operand.vmem [shape: f32[64,1], index: 2, kind: input, shape index: {}]
  %s3 = inlined_call_operand.vmem [shape: f32[64,64], index: 3, kind: input, shape index: {}]
  %s4 = inlined_call_operand.vmem [shape: f32[1,64], index: 4, kind: input, shape index: {}]
  %s5 = inlined_call_operand.vmem [shape: f32[1,8], index: 5, kind: output, shape index: {}]
  %s6 = sld [smem:[#allocation0]]
  $region30: #{cbfnet_forward.1} parent=0
    _
  %s8 = ssub.s32 1, %s6
  %s9 = scalar_select 0, %s8, %s6
  // Predicated region
  $region2: #{cbfnet_forward.1} parent=0 // pred_check
    _
  $region3: #{cbfnet_forward.1} parent=0 // pred_check_branch
    %11 = sbr.rel (0) target = $region5
  $region4: #{cbfnet_forward.1} parent=0 // pred_region
    _
  $region5: #{cbfnet_forward.1} parent=0 // pred_fallthru
    _
  // Predicated region
  $region6: #{cbfnet_forward.1} parent=0 // pred_check
    _
  $region7: #{cbfnet_forward.1} parent=0 // pred_check_branch
    %13 = sbr.rel (0) target = $region9
  $region8: #{cbfnet_forward.1} parent=0 // pred_region
    _
  $region9: #{cbfnet_forward.1} parent=0 // pred_fallthru
    _
  // Predicated region
  $region10: #{cbfnet_forward.1} parent=0 // pred_check
    _
  $region11: #{cbfnet_forward.1} parent=0 // pred_check_branch
    %15 = sbr.rel (0) target = $region13
  $region12: #{cbfnet_forward.1} parent=0 // pred_region
    _
  $region13: #{cbfnet_forward.1} parent=0 // pred_fallthru
    _
  // Predicated region
  $region14: #{cbfnet_forward.1} parent=0 // pred_check
    _
  $region15: #{cbfnet_forward.1} parent=0 // pred_check_branch
    %17 = sbr.rel (0) target = $region17
  $region16: #{cbfnet_forward.1} parent=0 // pred_region
    _
  $region17: #{cbfnet_forward.1} parent=0 // pred_fallthru
    _
  // Predicated region
  $region18: #{cbfnet_forward.1} parent=0 // pred_check
    _
  $region19: #{cbfnet_forward.1} parent=0 // pred_check_branch
    %19 = sbr.rel (0) target = $region21
  $region20: #{cbfnet_forward.1} parent=0 // pred_region
    _
  $region21: #{cbfnet_forward.1} parent=0 // pred_fallthru
    _
  %v20 = vld [vmem:[%s0] sm:$0x1]
  %v21 = vld [vmem:[%s1] sm:$0xff]
  %v22 = vld [vmem:[%s1 + $0x8] sm:$0xff]
  %v23 = vld [vmem:[%s1 + $0x10] sm:$0xff]
  %v24 = vld [vmem:[%s1 + $0x18] sm:$0xff]
  %v25 = vld [vmem:[%s1 + $0x20] sm:$0xff]
  %v26 = vld [vmem:[%s1 + $0x28] sm:$0xff]
  %v27 = vld [vmem:[%s1 + $0x30] sm:$0xff]
  %v28 = vld [vmem:[%s1 + $0x38] sm:$0xff]
  %v29 = vld [vmem:[%s2] sm:$0xff]
  %v30 = vld [vmem:[%s2 + $0x8] sm:$0xff]
  %v31 = vld [vmem:[%s2 + $0x10] sm:$0xff]
  %v32 = vld [vmem:[%s2 + $0x18] sm:$0xff]
  %v33 = vld [vmem:[%s2 + $0x20] sm:$0xff]
  %v34 = vld [vmem:[%s2 + $0x28] sm:$0xff]
  %v35 = vld [vmem:[%s2 + $0x30] sm:$0xff]
  %v36 = vld [vmem:[%s2 + $0x38] sm:$0xff]
  %v37 = vld [vmem:[%s3] sm:$0xff]
  %v38 = vld [vmem:[%s3 + $0x8] sm:$0xff]
  %v39 = vld [vmem:[%s3 + $0x10] sm:$0xff]
  %v40 = vld [vmem:[%s3 + $0x18] sm:$0xff]
  %v41 = vld [vmem:[%s3 + $0x20] sm:$0xff]
  %v42 = vld [vmem:[%s3 + $0x28] sm:$0xff]
  %v43 = vld [vmem:[%s3 + $0x30] sm:$0xff]
  %v44 = vld [vmem:[%s3 + $0x38] sm:$0xff]
  %v45 = vld [vmem:[%s4] sm:$0x1]
  %v47 = vlaneseq
  %v48 = vshrl.u32 %v47, 7
  %v49 = vsub.s32 0, %v48
  %v50 = vrot.slane %v20, %v49
  %v52 = vmul.f32 %v21, %v50
  %v53 = vmul.f32 %v22, %v50
  %v54 = vmul.f32 %v23, %v50
  %v55 = vmul.f32 %v24, %v50
  %v56 = vmul.f32 %v25, %v50
  %v57 = vmul.f32 %v26, %v50
  %v58 = vmul.f32 %v27, %v50
  %v59 = vmul.f32 %v28, %v50
  %vm60 = vcmask 31744
  %v61 = vsel %vm60, %v52, 0.0
  %62 = vadd.xlane.f32.xlu0 %v61
  %v63 = vpop.xlane.xlu0 %62
  %v64 = vsel %vm60, %v53, 0.0
  %65 = vadd.xlane.f32.xlu0 %v64
  %v66 = vpop.xlane.xlu0 %65
  %v67 = vsel %vm60, %v54, 0.0
  %68 = vadd.xlane.f32.xlu0 %v67
  %v69 = vpop.xlane.xlu0 %68
  %v70 = vsel %vm60, %v55, 0.0
  %71 = vadd.xlane.f32.xlu0 %v70
  %v72 = vpop.xlane.xlu0 %71
  %v73 = vsel %vm60, %v56, 0.0
  %74 = vadd.xlane.f32.xlu0 %v73
  %v75 = vpop.xlane.xlu0 %74
  %v76 = vsel %vm60, %v57, 0.0
  %77 = vadd.xlane.f32.xlu0 %v76
  %v78 = vpop.xlane.xlu0 %77
  %v79 = vsel %vm60, %v58, 0.0
  %80 = vadd.xlane.f32.xlu0 %v79
  %v81 = vpop.xlane.xlu0 %80
  %v82 = vsel %vm60, %v59, 0.0
  %83 = vadd.xlane.f32.xlu0 %v82
  %v84 = vpop.xlane.xlu0 %83
  %v85 = vadd.f32 %v63, %v29
  %v86 = vadd.f32 %v66, %v30
  %v87 = vadd.f32 %v69, %v31
  %v88 = vadd.f32 %v72, %v32
  %v89 = vadd.f32 %v75, %v33
  %v90 = vadd.f32 %v78, %v34
  %v91 = vadd.f32 %v81, %v35
  %v92 = vadd.f32 %v84, %v36
  %v93 = vtanh.pop %v85
  %v94 = vtanh.pop %v86
  %v95 = vtanh.pop %v87
  %v96 = vtanh.pop %v88
  %v97 = vtanh.pop %v89
  %v98 = vtanh.pop %v90
  %v99 = vtanh.pop %v91
  %v100 = vtanh.pop %v92
  %102 = vset.pattern.permute.xlu0 0
  %103 = vperm.xlu0 %102, %v93
  %v104 = vpop.permute.xlu0 %103
  %107 = vset.pattern.permute.xlu0 0
  %108 = vperm.xlu0 %107, %v94
  %v109 = vpop.permute.xlu0 %108
  %112 = vset.pattern.permute.xlu0 0
  %113 = vperm.xlu0 %112, %v95
  %v114 = vpop.permute.xlu0 %113
  %117 = vset.pattern.permute.xlu0 0
  %118 = vperm.xlu0 %117, %v96
  %v119 = vpop.permute.xlu0 %118
  %122 = vset.pattern.permute.xlu0 0
  %123 = vperm.xlu0 %122, %v97
  %v124 = vpop.permute.xlu0 %123
  %127 = vset.pattern.permute.xlu0 0
  %128 = vperm.xlu0 %127, %v98
  %v129 = vpop.permute.xlu0 %128
  %132 = vset.pattern.permute.xlu0 0
  %133 = vperm.xlu0 %132, %v99
  %v134 = vpop.permute.xlu0 %133
  %137 = vset.pattern.permute.xlu0 0
  %138 = vperm.xlu0 %137, %v100
  %v139 = vpop.permute.xlu0 %138
  %v141 = vmul.f32 %v37, %v104
  %v142 = vmul.f32 %v38, %v109
  %v143 = vmul.f32 %v39, %v114
  %v144 = vmul.f32 %v40, %v119
  %v145 = vmul.f32 %v41, %v124
  %v146 = vmul.f32 %v42, %v129
  %v147 = vmul.f32 %v43, %v134
  %v148 = vmul.f32 %v44, %v139
  %vm149 = vcmask 523264
  %v150 = vsel %vm149, %v141, 0.0
  %v151 = vsel %vm149, %v142, 0.0
  %v152 = vadd.f32 %v150, %v151
  %v153 = vsel %vm149, %v143, 0.0
  %v154 = vadd.f32 %v152, %v153
  %v155 = vsel %vm149, %v144, 0.0
  %v156 = vadd.f32 %v154, %v155
  %v157 = vsel %vm149, %v145, 0.0
  %v158 = vadd.f32 %v156, %v157
  %v159 = vsel %vm149, %v146, 0.0
  %v160 = vadd.f32 %v158, %v159
  %v161 = vsel %vm149, %v147, 0.0
  %v162 = vadd.f32 %v160, %v161
  %v163 = vsel %vm149, %v148, 0.0
  %v164 = vadd.f32 %v162, %v163
  %v165 = vrot.slane %v164, 4
  %v166 = vadd.f32 %v164, %v165
  %v167 = vrot.slane %v166, 2
  %v168 = vadd.f32 %v166, %v167
  %v169 = vrot.slane %v168, 1
  %v170 = vadd.f32 %v168, %v169
  %v171 = vadd.f32 %v170, %v45
  %v172 = vtanh.pop %v171
  %vm173 = vcmask 516096
  %v174 = vsel %vm173, %v172, 0.0
  %175 = vadd.xlane.f32.xlu0 %v174
  %v176 = vpop.xlane.xlu0 %175
  %v177 = vmul.f32 %v176, 0.015625
  %v178 = vmul.f32 %v93, %v93
  %v179 = vmul.f32 %v94, %v94
  %v180 = vmul.f32 %v95, %v95
  %v181 = vmul.f32 %v96, %v96
  %v182 = vmul.f32 %v97, %v97
  %v183 = vmul.f32 %v98, %v98
  %v184 = vmul.f32 %v99, %v99
  %v185 = vmul.f32 %v100, %v100
  %v186 = vsub.f32 1.0, %v178
  %v187 = vsub.f32 1.0, %v179
  %v188 = vsub.f32 1.0, %v180
  %v189 = vsub.f32 1.0, %v181
  %v190 = vsub.f32 1.0, %v182
  %v191 = vsub.f32 1.0, %v183
  %v192 = vsub.f32 1.0, %v184
  %v193 = vsub.f32 1.0, %v185
  %v194 = vmul.f32 %v172, %v172
  %v195 = vsub.f32 1.0, %v194
  %v196 = vlaneseq
  %v197 = vshrl.u32 %v196, 7
  %v198 = vsub.s32 0, %v197
  %v199 = vrot.slane %v195, %v198
  %v200 = vmul.f32 %v37, %v199
  %v201 = vmul.f32 %v38, %v199
  %v202 = vmul.f32 %v39, %v199
  %v203 = vmul.f32 %v40, %v199
  %v204 = vmul.f32 %v41, %v199
  %v205 = vmul.f32 %v42, %v199
  %v206 = vmul.f32 %v43, %v199
  %v207 = vmul.f32 %v44, %v199
  %v208 = vsel %vm149, %v200, 0.0
  %209 = vadd.xlane.f32.xlu0 %v208
  %v210 = vpop.xlane.xlu0 %209
  %v211 = vsel %vm149, %v201, 0.0
  %212 = vadd.xlane.f32.xlu0 %v211
  %v213 = vpop.xlane.xlu0 %212
  %v214 = vsel %vm149, %v202, 0.0
  %215 = vadd.xlane.f32.xlu0 %v214
  %v216 = vpop.xlane.xlu0 %215
  %v217 = vsel %vm149, %v203, 0.0
  %218 = vadd.xlane.f32.xlu0 %v217
  %v219 = vpop.xlane.xlu0 %218
  %v220 = vsel %vm149, %v204, 0.0
  %221 = vadd.xlane.f32.xlu0 %v220
  %v222 = vpop.xlane.xlu0 %221
  %v223 = vsel %vm149, %v205, 0.0
  %224 = vadd.xlane.f32.xlu0 %v223
  %v225 = vpop.xlane.xlu0 %224
  %v226 = vsel %vm149, %v206, 0.0
  %227 = vadd.xlane.f32.xlu0 %v226
  %v228 = vpop.xlane.xlu0 %227
  %v229 = vsel %vm149, %v207, 0.0
  %230 = vadd.xlane.f32.xlu0 %v229
  %v231 = vpop.xlane.xlu0 %230
  %v232 = vmul.f32 %v186, %v210
  %v233 = vmul.f32 %v187, %v213
  %v234 = vmul.f32 %v188, %v216
  %v235 = vmul.f32 %v189, %v219
  %v236 = vmul.f32 %v190, %v222
  %v237 = vmul.f32 %v191, %v225
  %v238 = vmul.f32 %v192, %v228
  %v239 = vmul.f32 %v193, %v231
  %241 = vset.pattern.permute.xlu0 0
  %242 = vperm.xlu0 %241, %v232
  %v243 = vpop.permute.xlu0 %242
  %246 = vset.pattern.permute.xlu0 0
  %247 = vperm.xlu0 %246, %v233
  %v248 = vpop.permute.xlu0 %247
  %251 = vset.pattern.permute.xlu0 0
  %252 = vperm.xlu0 %251, %v234
  %v253 = vpop.permute.xlu0 %252
  %256 = vset.pattern.permute.xlu0 0
  %257 = vperm.xlu0 %256, %v235
  %v258 = vpop.permute.xlu0 %257
  %261 = vset.pattern.permute.xlu0 0
  %262 = vperm.xlu0 %261, %v236
  %v263 = vpop.permute.xlu0 %262
  %266 = vset.pattern.permute.xlu0 0
  %267 = vperm.xlu0 %266, %v237
  %v268 = vpop.permute.xlu0 %267
  %271 = vset.pattern.permute.xlu0 0
  %272 = vperm.xlu0 %271, %v238
  %v273 = vpop.permute.xlu0 %272
  %276 = vset.pattern.permute.xlu0 0
  %277 = vperm.xlu0 %276, %v239
  %v278 = vpop.permute.xlu0 %277
  %v280 = vmul.f32 %v21, %v243
  %v281 = vmul.f32 %v22, %v248
  %v282 = vmul.f32 %v23, %v253
  %v283 = vmul.f32 %v24, %v258
  %v284 = vmul.f32 %v25, %v263
  %v285 = vmul.f32 %v26, %v268
  %v286 = vmul.f32 %v27, %v273
  %v287 = vmul.f32 %v28, %v278
  %v288 = vsel %vm60, %v280, 0.0
  %v289 = vsel %vm60, %v281, 0.0
  %v290 = vadd.f32 %v288, %v289
  %v291 = vsel %vm60, %v282, 0.0
  %v292 = vadd.f32 %v290, %v291
  %v293 = vsel %vm60, %v283, 0.0
  %v294 = vadd.f32 %v292, %v293
  %v295 = vsel %vm60, %v284, 0.0
  %v296 = vadd.f32 %v294, %v295
  %v297 = vsel %vm60, %v285, 0.0
  %v298 = vadd.f32 %v296, %v297
  %v299 = vsel %vm60, %v286, 0.0
  %v300 = vadd.f32 %v298, %v299
  %v301 = vsel %vm60, %v287, 0.0
  %v302 = vadd.f32 %v300, %v301
  %v303 = vrot.slane %v302, 4
  %v304 = vadd.f32 %v302, %v303
  %v305 = vrot.slane %v304, 2
  %v306 = vadd.f32 %v304, %v305
  %v307 = vrot.slane %v306, 1
  %v308 = vadd.f32 %v306, %v307
  %v309 = vmul.f32 %v308, 0.015625
  %vm310 = vcmask 0
  %311 = vst.msk [vmem:[%s5] sm:$0x1] %vm310, %v177
  %313 = vrot.lane.b32.xlu0 %v309, 1
  %v314 = vpop.permute.xlu0 %313
  %vm316 = vcmask 32776
  %317 = vst.msk [vmem:[%s5] sm:$0x1] %vm316, %v314
  %vm318 = vcmask 57384
  %319 = vst.msk [vmem:[%s5] sm:$0x1] %vm318, 0.0
  // Predicated region
  $region22: #{cbfnet_forward.1} parent=0 // pred_check
    _
  $region23: #{cbfnet_forward.1} parent=0 // pred_check_branch
    %321 = sbr.rel (0) target = $region25
  $region24: #{cbfnet_forward.1} parent=0 // pred_region
    _
  $region25: #{cbfnet_forward.1} parent=0 // pred_fallthru
    _
  // Predicated region
  $region26: #{cbfnet_forward.1} parent=0 // pred_check
    _
  $region27: #{cbfnet_forward.1} parent=0 // pred_check_branch
    %323 = sbr.rel (0) target = $region29
  $region28: #{cbfnet_forward.1} parent=0 // pred_region
    _
  $region29: #{cbfnet_forward.1} parent=0 // pred_fallthru
    _

</llo_original>
